<compile_context>
chip_gen: v5e
topology: v5e:2x2
jax: 0.10.0
libtpu: 0.0.40
codegen_flags: <defaults>
</compile_context>

<pallas_src>
import math

import jax
import jax.numpy as jnp
from jax.experimental import pallas as pl
from jax.experimental.pallas import tpu as pltpu


def _score_kernel(prec_t_ref, mean_ref, x_ref, o_ref):
    # diff[b, j] = mean[j] - x[b, j]      (VPU; (1, Lp) mean broadcasts over rows)
    diff = mean_ref[...] - x_ref[...]                                # (TM, Lp)
    # out[b, i] = sum_j diff[b, j] * prec[i, j] = diff @ prec^T      (MXU)
    out = jnp.dot(diff, prec_t_ref[...],
                  preferred_element_type=jnp.float32,
                  precision=jax.lax.Precision.HIGHEST)               # (TM, Lp) f32
    o_ref[...] = out.astype(o_ref.dtype)


def _round_up(n: int, m: int) -> int:
    return ((n + m - 1) // m) * m


def _vmem_limit_bytes() -> int:
    """Generation-aware scoped VMEM limit (v7x: 64 MiB/TC, v5e/v6e: 128 MiB)."""
    try:
        cap = int(pltpu.get_tpu_info().vmem_capacity_bytes)
    except Exception:
        cap = 64 << 20  # conservative fallback (v7x per-TensorCore VMEM)
    return min(int(cap * 0.75), 96 << 20)


def _choose_tm(b_rows: int, lp: int, vmem_limit: int) -> int:
    """Batch-tile rows: as large as the VMEM budget allows (>=512 preferred for
    HBM roofline), but capped so large batches keep several grid steps."""
    # Resident blocks (double-buffered by default): prec^T (lp,lp) + mean (1,lp->8,lp).
    resident = 2 * lp * lp * 4 + 2 * 8 * lp * 4
    # Streamed x + out, each double-buffered: 2 arrays * 2 bufs * TM * lp * 4B.
    budget = int(vmem_limit * 0.7) - resident
    tm = max(budget // (16 * lp), 8)
    tm = min((tm // 8) * 8, 2048)            # diminishing returns past ~2048 rows
    if b_rows > 512:
        # Keep >= 2 (ideally 4-8) grid steps: pipelining + v7x 2-TC sharding.
        tm_split = max(_round_up(-(-b_rows // 8), 8), 512)
        tm = min(tm, tm_split)
    tm = max(tm, 8)
    if tm >= b_rows:
        tm = b_rows                          # single full block (== array extent)
    return tm


def gaussian_score(prec_mat: jax.Array, mean: jax.Array, x: jax.Array) -> jax.Array:
    """Pallas implementation of GaussianScoreModel.forward.

    prec_mat: (L, L) float32 precision matrix (inverse covariance)
    mean:     (L,)   float32
    x:        (..., L) float32
    returns:  (..., L) float32
    """
    L = prec_mat.shape[0]
    assert prec_mat.shape == (L, L)
    assert mean.shape == (L,)
    assert x.shape[-1] == L

    batch_shape = x.shape[:-1]
    B = int(math.prod(batch_shape)) if batch_shape else 1
    x2d = x.reshape(B, L)

    # One-time wrapper transpose: kernel matmul needs no in-kernel XLU transpose.
    prec_t = prec_mat.T
    mean2d = mean.reshape(1, L)

    # Lane-dense packing for L < 128: pack k rows per lane row with a
    # block-diagonal prec^T so the output last dim is a full 128 lanes.
    if L < 128 and 128 % L == 0 and B % (128 // L) == 0:
        k = 128 // L
        prec_t = jnp.kron(jnp.eye(k, dtype=prec_t.dtype), prec_t)   # (k*L, k*L)
        mean2d = jnp.tile(mean2d, (1, k))                           # (1, k*L)
        x2d = x2d.reshape(B // k, k * L)                            # free, row-major

    b_rows, lp = x2d.shape
    vmem_limit = _vmem_limit_bytes()
    tm = _choose_tm(b_rows, lp, vmem_limit)
    grid = (pl.cdiv(b_rows, tm),)   # ragged last block handled by Pallas

    out2d = pl.pallas_call(
        _score_kernel,
        out_shape=jax.ShapeDtypeStruct((b_rows, lp), x.dtype),
        grid_spec=pltpu.PrefetchScalarGridSpec(
            num_scalar_prefetch=0,
            grid=grid,
            in_specs=[
                # prec^T: VMEM-resident across all grid steps.
                pl.BlockSpec((lp, lp), lambda i: (0, 0)),
                # mean: VMEM-resident, broadcasts over the batch rows.
                pl.BlockSpec((1, lp), lambda i: (0, 0)),
                # x: streamed along the batch dim, pipelined by the grid.
                pl.BlockSpec((tm, lp), lambda i: (i, 0)),
            ],
            out_specs=pl.BlockSpec((tm, lp), lambda i: (i, 0)),
        ),
        compiler_params=pltpu.CompilerParams(
            # Independent output tiles per step -> parallel (v7x 2-TC sharding).
            dimension_semantics=("parallel",),
            vmem_limit_bytes=vmem_limit,
        ),
    )(prec_t, mean2d, x2d)

    return out2d.reshape(*batch_shape, L)


if __name__ == "__main__":
    key = jax.random.PRNGKey(0)
    k_a, k_mean, k_x = jax.random.split(key, 3)

    L = 32
    batch = (2, 8)          # x: (..., L) = (2, 8, 32)

    # Deterministic symmetric positive-definite covariance matrix.
    A = jax.random.normal(k_a, (L, L), dtype=jnp.float32)
    covar_mat = A @ A.T + L * jnp.eye(L, dtype=jnp.float32)
    # prec_mat buffer (as in the PyTorch __init__'s torch.inverse).
    prec_mat = jnp.linalg.inv(covar_mat)
    mean = jax.random.normal(k_mean, (L,), dtype=jnp.float32)

    x = jax.random.normal(k_x, (*batch, L), dtype=jnp.float32)

    out = jax.block_until_ready(gaussian_score(prec_mat, mean, x))

    # Pure-JAX reference of the PyTorch einsum (full-f32 precision to match
    # the kernel's HIGHEST-precision MXU matmul).
    ref = jnp.einsum('ij,...j->...i', prec_mat, mean - x,
                     precision=jax.lax.Precision.HIGHEST)
    assert out.shape == x.shape
    assert jnp.allclose(out, ref, atol=1e-5, rtol=1e-5), \
        float(jnp.max(jnp.abs(out - ref)))

    print("KERNEL_OK")
</pallas_src>

<mosaic_0001>
module attributes {stable_mosaic.version = 11 : i64} {
  func.func @_score_kernel(%arg0: i32, %arg1: memref<128x128xf32, #tpu.memory_space<vmem>>, %arg2: memref<1x128xf32, #tpu.memory_space<vmem>>, %arg3: memref<4x128xf32, #tpu.memory_space<vmem>>, %arg4: memref<4x128xf32, #tpu.memory_space<vmem>>) attributes {dimension_semantics = [#tpu.dimension_semantics<parallel>], iteration_bounds = array<i64: 1>, scalar_prefetch = 0 : i64, scratch_operands = 0 : i64, tpu.core_type = #tpu.core_type<tc>, window_params = [{pipeline_mode = #tpu.pipeline_mode<synchronous>, transform_indices = @transform_0, window_bounds = array<i64: 128, 128>}, {pipeline_mode = #tpu.pipeline_mode<synchronous>, transform_indices = @transform_1, window_bounds = array<i64: 1, 128>}, {transform_indices = @transform_2, window_bounds = array<i64: 4, 128>}, {transform_indices = @transform_3, window_bounds = array<i64: 4, 128>}]} {
    %c0 = arith.constant 0 : index
    %c0_0 = arith.constant 0 : index
    %0 = vector.load %arg2[%c0, %c0_0] : memref<1x128xf32, #tpu.memory_space<vmem>>, vector<1x128xf32>
    %c0_1 = arith.constant 0 : index
    %c0_2 = arith.constant 0 : index
    %1 = vector.load %arg3[%c0_1, %c0_2] : memref<4x128xf32, #tpu.memory_space<vmem>>, vector<4x128xf32>
    %2 = vector.broadcast %0 : vector<1x128xf32> to vector<4x128xf32>
    %3 = arith.subf %2, %1 : vector<4x128xf32>
    %c0_3 = arith.constant 0 : index
    %c0_4 = arith.constant 0 : index
    %4 = vector.load %arg1[%c0_3, %c0_4] : memref<128x128xf32, #tpu.memory_space<vmem>>, vector<128x128xf32>
    %cst = arith.constant dense<0.000000e+00> : vector<4x128xf32>
    %5 = tpu.matmul %3, %4, %cst {dimension_numbers = #tpu.dot_dimension_numbers<[1], [0], [0], [1], [0, 0, 1, 1], [], []>, precision = #tpu.contract_precision<fp32>} : vector<4x128xf32>, vector<128x128xf32>, vector<4x128xf32> -> vector<4x128xf32>
    %c0_5 = arith.constant 0 : index
    %c0_6 = arith.constant 0 : index
    %6 = vector.load %arg4[%c0_5, %c0_6] : memref<4x128xf32, #tpu.memory_space<vmem>>, vector<4x128xf32>
    tpu.vector_store %arg4[%c0_5, %c0_6], %5 {strides = array<i32>} : memref<4x128xf32, #tpu.memory_space<vmem>>, vector<4x128xf32>,
    return
  }
  func.func @transform_0(%arg0: i32) -> (i32, i32) {
    %c0_i32 = arith.constant 0 : i32
    %c0_i32_0 = arith.constant 0 : i32
    %c0_i32_1 = arith.constant 0 : i32
    return %c0_i32, %c0_i32_0 : i32, i32
  }
  func.func @transform_1(%arg0: i32) -> (i32, i32) {
    %c0_i32 = arith.constant 0 : i32
    %c0_i32_0 = arith.constant 0 : i32
    %c0_i32_1 = arith.constant 0 : i32
    return %c0_i32, %c0_i32_0 : i32, i32
  }
  func.func @transform_2(%arg0: i32) -> (i32, i32) {
    %c0_i32 = arith.constant 0 : i32
    %c0_i32_0 = arith.constant 0 : i32
    return %arg0, %c0_i32 : i32, i32
  }
  func.func @transform_3(%arg0: i32) -> (i32, i32) {
    %c0_i32 = arith.constant 0 : i32
    %c0_i32_0 = arith.constant 0 : i32
    return %arg0, %c0_i32 : i32, i32
  }
}

</mosaic_0001>

<llo_original>
// kernel: tpu_custom_call.1
$region0: #{tpu_custom_call.1}
  #allocation0 [shape = 'u32[]', space=smem, size = 0x4, offset = 0x4, fixed_abs, tag = 'smem constant byte address 0x4 - core index']
  #allocation1 [shape = 'u32[72,128]{1,0:T(1,128)}', space=vmem, size = 0x9000, scoped, tag = 'internal scratch']
  %s0 = inlined_call_operand.hbm [shape: f32[128,128], index: 0, kind: input, shape index: {}]
  %s1 = inlined_call_operand.hbm [shape: f32[1,128], index: 1, kind: input, shape index: {}]
  %s2 = inlined_call_operand.hbm [shape: f32[4,128], index: 2, kind: input, shape index: {}]
  %s3 = inlined_call_operand.hbm [shape: f32[4,128], index: 3, kind: output, shape index: {}]
  %s4 = sld [smem:[#allocation0]]
  $region34: #{tpu_custom_call.1} parent=0
    _
  %s6 = ssub.s32 1, %s4
  %s7 = scalar_select 0, %s6, %s4
  $region1: #{tpu_custom_call.1} parent=0
    #allocation2 [shape = 'u8[65536]{0}', space=vmem, size = 0x10000, scoped, tag = 'input window, operand 0, single buffered']
    #allocation3 [shape = 's32[1]{0}', space=sflag, size = 0x4, scoped, tag = 'scoped memory for tpu_custom_call.1']
    #allocation4 [shape = 's32[1]{0}', space=sflag, size = 0x4, scoped, tag = 'scoped memory for tpu_custom_call.1']
    #allocation5 [shape = 'u8[512]{0}', space=vmem, size = 0x400, scoped, tag = 'input window, operand 1, single buffered']
    #allocation6 [shape = 's32[1]{0}', space=sflag, size = 0x4, scoped, tag = 'scoped memory for tpu_custom_call.1']
    #allocation7 [shape = 'u8[2048]{0}', space=vmem, size = 0x800, scoped, tag = 'input window, operand 2, single buffered']
    #allocation8 [shape = 'u8[2048]{0}', space=vmem, size = 0x800, scoped, tag = 'output window, operand 0, single buffered']
    %8 = vsyncpa [#allocation3], 0
    %9 = vsyncpa [#allocation6], 0
    %10 = vsyncpa [#allocation4], 0
    // Predicated region
    $region2: #{tpu_custom_call.1} parent=1 // pred_check
      _
    $region3: #{tpu_custom_call.1} parent=1 // pred_check_branch
      %12 = sbr.rel (0) target = $region5
    $region4: #{tpu_custom_call.1} parent=1 // pred_region
      %14 = vsyncadd [#allocation3], 0
      %s15 = sshll.u32 %s0, 4
      %s16 = int_to_ptr.hbm [resolvable:$true] %s15
      %s17 = sshll.u32 [#allocation2], 4
      %s18 = int_to_ptr.vmem [resolvable:$true] %s17
      %23 = dma.hbm_to_vmem [thread:$0]  %s16, 2048, %s18, [#allocation3], 128, 128, 8
    $region5: #{tpu_custom_call.1} parent=1 // pred_fallthru
      _
    // Predicated region
    $region6: #{tpu_custom_call.1} parent=1 // pred_check
      _
    $region7: #{tpu_custom_call.1} parent=1 // pred_check_branch
      %25 = sbr.rel (0) target = $region9
    $region8: #{tpu_custom_call.1} parent=1 // pred_region
      %27 = vsyncadd [#allocation6], 0
      %s29 = sshll.u32 %s1, 4
      %s30 = int_to_ptr.hbm [resolvable:$true] %s29
      %s31 = sshll.u32 [#allocation5], 4
      %s32 = int_to_ptr.vmem [resolvable:$true] %s31
      %34 = dma.hbm_to_vmem [thread:$0]  %s30, 16, %s32, [#allocation6]
    $region9: #{tpu_custom_call.1} parent=1 // pred_fallthru
      _
    // Predicated region
    $region10: #{tpu_custom_call.1} parent=1 // pred_check
      _
    $region11: #{tpu_custom_call.1} parent=1 // pred_check_branch
      %36 = sbr.rel (0) target = $region13
    $region12: #{tpu_custom_call.1} parent=1 // pred_region
      %38 = vsyncadd [#allocation6], 0
      %s40 = sshll.u32 %s2, 4
      %s41 = int_to_ptr.hbm [resolvable:$true] %s40
      %s42 = sshll.u32 [#allocation7], 4
      %s43 = int_to_ptr.vmem [resolvable:$true] %s42
      %45 = dma.hbm_to_vmem [thread:$0]  %s41, 64, %s43, [#allocation6]
    $region13: #{tpu_custom_call.1} parent=1 // pred_fallthru
      _
    // Predicated region
    $region14: #{tpu_custom_call.1} parent=1 // pred_check
      _
    $region15: #{tpu_custom_call.1} parent=1 // pred_check_branch
      %47 = sbr.rel (0) target = $region17
    $region16: #{tpu_custom_call.1} parent=1 // pred_region
      %49 = dma.done [#allocation3], 2048
    $region17: #{tpu_custom_call.1} parent=1 // pred_fallthru
      _
    // Predicated region
    $region18: #{tpu_custom_call.1} parent=1 // pred_check
      _
    $region19: #{tpu_custom_call.1} parent=1 // pred_check_branch
      %51 = sbr.rel (0) target = $region21
    $region20: #{tpu_custom_call.1} parent=1 // pred_region
      %53 = dma.done [#allocation6], 16
    $region21: #{tpu_custom_call.1} parent=1 // pred_fallthru
      _
    // Predicated region
    $region22: #{tpu_custom_call.1} parent=1 // pred_check
      _
    $region23: #{tpu_custom_call.1} parent=1 // pred_check_branch
      %55 = sbr.rel (0) target = $region25
    $region24: #{tpu_custom_call.1} parent=1 // pred_region
      %57 = dma.done [#allocation6], 64
    $region25: #{tpu_custom_call.1} parent=1 // pred_fallthru
      _
    %v58 = vld [vmem:[#allocation5] sm:$0x1]
    %v59 = vld [vmem:[#allocation7] sm:$0xf]
    %v61 = vperm.slane %v58, 0
    %v63 = vsub.f32 %v61, %v59
    %v64 = vld [vmem:[#allocation2] sm:$0xff]
    %v65 = vld [vmem:[#allocation2 + $0x8] sm:$0xff]
    %v66 = vld [vmem:[#allocation2 + $0x10] sm:$0xff]
    %v67 = vld [vmem:[#allocation2 + $0x18] sm:$0xff]
    %v68 = vld [vmem:[#allocation2 + $0x20] sm:$0xff]
    %v69 = vld [vmem:[#allocation2 + $0x28] sm:$0xff]
    %v70 = vld [vmem:[#allocation2 + $0x30] sm:$0xff]
    %v71 = vld [vmem:[#allocation2 + $0x38] sm:$0xff]
    %v72 = vld [vmem:[#allocation2 + $0x40] sm:$0xff]
    %v73 = vld [vmem:[#allocation2 + $0x48] sm:$0xff]
    %v74 = vld [vmem:[#allocation2 + $0x50] sm:$0xff]
    %v75 = vld [vmem:[#allocation2 + $0x58] sm:$0xff]
    %v76 = vld [vmem:[#allocation2 + $0x60] sm:$0xff]
    %v77 = vld [vmem:[#allocation2 + $0x68] sm:$0xff]
    %v78 = vld [vmem:[#allocation2 + $0x70] sm:$0xff]
    %v79 = vld [vmem:[#allocation2 + $0x78] sm:$0xff]
    %v80 = vand.u32 %v79, 4294901760
    %81 = vmatpush.msra.mxu0 %v80
    %v82 = vand.u32 %v78, 4294901760
    %83 = vmatpush.msra.mxu0 %v82
    %v84 = vand.u32 %v77, 4294901760
    %85 = vmatpush.msra.mxu0 %v84
    %v86 = vand.u32 %v76, 4294901760
    %87 = vmatpush.msra.mxu0 %v86
    %v88 = vand.u32 %v75, 4294901760
    %89 = vmatpush.msra.mxu0 %v88
    %v90 = vand.u32 %v74, 4294901760
    %91 = vmatpush.msra.mxu0 %v90
    %v92 = vand.u32 %v73, 4294901760
    %93 = vmatpush.msra.mxu0 %v92
    %v94 = vand.u32 %v72, 4294901760
    %95 = vmatpush.msra.mxu0 %v94
    %v96 = vand.u32 %v71, 4294901760
    %97 = vmatpush.msra.mxu0 %v96
    %v98 = vand.u32 %v70, 4294901760
    %99 = vmatpush.msra.mxu0 %v98
    %v100 = vand.u32 %v69, 4294901760
    %101 = vmatpush.msra.mxu0 %v100
    %v102 = vand.u32 %v68, 4294901760
    %103 = vmatpush.msra.mxu0 %v102
    %v104 = vand.u32 %v67, 4294901760
    %105 = vmatpush.msra.mxu0 %v104
    %v106 = vand.u32 %v66, 4294901760
    %107 = vmatpush.msra.mxu0 %v106
    %v108 = vand.u32 %v65, 4294901760
    %109 = vmatpush.msra.mxu0 %v108
    %v110 = vand.u32 %v64, 4294901760
    %111 = vmatpush.msra.mxu0 %v110
    %v112 = vand.u32 %v63, 4294901760
    %v113 = vsub.f32 %v63, %v112
    %v114 = vand.u32 %v113, 4294901760
    %v115 = vsub.f32 %v113, %v114
    %v116 = vand.u32 %v115, 4294901760
    %117 = vmatmul.f32.gmra.mxu0 %v116
    %v118 = vpop.f32.mrf.mxu0
    %v119 = vadd.f32 0.0, %v118
    %120 = vdwg.mxu0
    %v121 = vand.u32 %v79, 4294901760
    %v122 = vsub.f32 %v79, %v121
    %v123 = vand.u32 %v122, 4294901760
    %v124 = vsub.f32 %v122, %v123
    %v125 = vand.u32 %v124, 4294901760
    %126 = vmatpush.msra.mxu0 %v125
    %v127 = vand.u32 %v78, 4294901760
    %v128 = vsub.f32 %v78, %v127
    %v129 = vand.u32 %v128, 4294901760
    %v130 = vsub.f32 %v128, %v129
    %v131 = vand.u32 %v130, 4294901760
    %132 = vmatpush.msra.mxu0 %v131
    %v133 = vand.u32 %v77, 4294901760
    %v134 = vsub.f32 %v77, %v133
    %v135 = vand.u32 %v134, 4294901760
    %v136 = vsub.f32 %v134, %v135
    %v137 = vand.u32 %v136, 4294901760
    %138 = vmatpush.msra.mxu0 %v137
    %v139 = vand.u32 %v76, 4294901760
    %v140 = vsub.f32 %v76, %v139
    %v141 = vand.u32 %v140, 4294901760
    %v142 = vsub.f32 %v140, %v141
    %v143 = vand.u32 %v142, 4294901760
    %144 = vmatpush.msra.mxu0 %v143
    %v145 = vand.u32 %v75, 4294901760
    %v146 = vsub.f32 %v75, %v145
    %v147 = vand.u32 %v146, 4294901760
    %v148 = vsub.f32 %v146, %v147
    %v149 = vand.u32 %v148, 4294901760
    %150 = vmatpush.msra.mxu0 %v149
    %v151 = vand.u32 %v74, 4294901760
    %v152 = vsub.f32 %v74, %v151
    %v153 = vand.u32 %v152, 4294901760
    %v154 = vsub.f32 %v152, %v153
    %v155 = vand.u32 %v154, 4294901760
    %156 = vmatpush.msra.mxu0 %v155
    %v157 = vand.u32 %v73, 4294901760
    %v158 = vsub.f32 %v73, %v157
    %v159 = vand.u32 %v158, 4294901760
    %v160 = vsub.f32 %v158, %v159
    %v161 = vand.u32 %v160, 4294901760
    %162 = vmatpush.msra.mxu0 %v161
    %v163 = vand.u32 %v72, 4294901760
    %v164 = vsub.f32 %v72, %v163
    %v165 = vand.u32 %v164, 4294901760
    %v166 = vsub.f32 %v164, %v165
    %v167 = vand.u32 %v166, 4294901760
    %168 = vmatpush.msra.mxu0 %v167
    %v169 = vand.u32 %v71, 4294901760
    %v170 = vsub.f32 %v71, %v169
    %v171 = vand.u32 %v170, 4294901760
    %v172 = vsub.f32 %v170, %v171
    %v173 = vand.u32 %v172, 4294901760
    %174 = vmatpush.msra.mxu0 %v173
    %v175 = vand.u32 %v70, 4294901760
    %v176 = vsub.f32 %v70, %v175
    %v177 = vand.u32 %v176, 4294901760
    %v178 = vsub.f32 %v176, %v177
    %v179 = vand.u32 %v178, 4294901760
    %180 = vmatpush.msra.mxu0 %v179
    %v181 = vand.u32 %v69, 4294901760
    %v182 = vsub.f32 %v69, %v181
    %v183 = vand.u32 %v182, 4294901760
    %v184 = vsub.f32 %v182, %v183
    %v185 = vand.u32 %v184, 4294901760
    %186 = vmatpush.msra.mxu0 %v185
    %v187 = vand.u32 %v68, 4294901760
    %v188 = vsub.f32 %v68, %v187
    %v189 = vand.u32 %v188, 4294901760
    %v190 = vsub.f32 %v188, %v189
    %v191 = vand.u32 %v190, 4294901760
    %192 = vmatpush.msra.mxu0 %v191
    %v193 = vand.u32 %v67, 4294901760
    %v194 = vsub.f32 %v67, %v193
    %v195 = vand.u32 %v194, 4294901760
    %v196 = vsub.f32 %v194, %v195
    %v197 = vand.u32 %v196, 4294901760
    %198 = vmatpush.msra.mxu0 %v197
    %v199 = vand.u32 %v66, 4294901760
    %v200 = vsub.f32 %v66, %v199
    %v201 = vand.u32 %v200, 4294901760
    %v202 = vsub.f32 %v200, %v201
    %v203 = vand.u32 %v202, 4294901760
    %204 = vmatpush.msra.mxu0 %v203
    %v205 = vand.u32 %v65, 4294901760
    %v206 = vsub.f32 %v65, %v205
    %v207 = vand.u32 %v206, 4294901760
    %v208 = vsub.f32 %v206, %v207
    %v209 = vand.u32 %v208, 4294901760
    %210 = vmatpush.msra.mxu0 %v209
    %v211 = vand.u32 %v64, 4294901760
    %v212 = vsub.f32 %v64, %v211
    %v213 = vand.u32 %v212, 4294901760
    %v214 = vsub.f32 %v212, %v213
    %v215 = vand.u32 %v214, 4294901760
    %216 = vmatpush.msra.mxu0 %v215
    %v217 = vand.u32 %v63, 4294901760
    %218 = vmatmul.f32.gmra.mxu0 %v217
    %v219 = vpop.f32.mrf.mxu0
    %v220 = vadd.f32 %v119, %v219
    %221 = vdwg.mxu0
    %v222 = vand.u32 %v79, 4294901760
    %v223 = vsub.f32 %v79, %v222
    %224 = vmatpush.msra.mxu0 %v223
    %v225 = vand.u32 %v78, 4294901760
    %v226 = vsub.f32 %v78, %v225
    %227 = vmatpush.msra.mxu0 %v226
    %v228 = vand.u32 %v77, 4294901760
    %v229 = vsub.f32 %v77, %v228
    %230 = vmatpush.msra.mxu0 %v229
    %v231 = vand.u32 %v76, 4294901760
    %v232 = vsub.f32 %v76, %v231
    %233 = vmatpush.msra.mxu0 %v232
    %v234 = vand.u32 %v75, 4294901760
    %v235 = vsub.f32 %v75, %v234
    %236 = vmatpush.msra.mxu0 %v235
    %v237 = vand.u32 %v74, 4294901760
    %v238 = vsub.f32 %v74, %v237
    %239 = vmatpush.msra.mxu0 %v238
    %v240 = vand.u32 %v73, 4294901760
    %v241 = vsub.f32 %v73, %v240
    %242 = vmatpush.msra.mxu0 %v241
    %v243 = vand.u32 %v72, 4294901760
    %v244 = vsub.f32 %v72, %v243
    %245 = vmatpush.msra.mxu0 %v244
    %v246 = vand.u32 %v71, 4294901760
    %v247 = vsub.f32 %v71, %v246
    %248 = vmatpush.msra.mxu0 %v247
    %v249 = vand.u32 %v70, 4294901760
    %v250 = vsub.f32 %v70, %v249
    %251 = vmatpush.msra.mxu0 %v250
    %v252 = vand.u32 %v69, 4294901760
    %v253 = vsub.f32 %v69, %v252
    %254 = vmatpush.msra.mxu0 %v253
    %v255 = vand.u32 %v68, 4294901760
    %v256 = vsub.f32 %v68, %v255
    %257 = vmatpush.msra.mxu0 %v256
    %v258 = vand.u32 %v67, 4294901760
    %v259 = vsub.f32 %v67, %v258
    %260 = vmatpush.msra.mxu0 %v259
    %v261 = vand.u32 %v66, 4294901760
    %v262 = vsub.f32 %v66, %v261
    %263 = vmatpush.msra.mxu0 %v262
    %v264 = vand.u32 %v65, 4294901760
    %v265 = vsub.f32 %v65, %v264
    %266 = vmatpush.msra.mxu0 %v265
    %v267 = vand.u32 %v64, 4294901760
    %v268 = vsub.f32 %v64, %v267
    %269 = vmatpush.msra.mxu0 %v268
    %v270 = vand.u32 %v63, 4294901760
    %v271 = vsub.f32 %v63, %v270
    %272 = vmatmul.f32.gmra.mxu0 %v271
    %v273 = vpop.f32.mrf.mxu0
    %v274 = vadd.f32 %v220, %v273
    %275 = vdwg.mxu0
    %v276 = vand.u32 %v79, 4294901760
    %277 = vmatpush.msra.mxu0 %v276
    %v278 = vand.u32 %v78, 4294901760
    %279 = vmatpush.msra.mxu0 %v278
    %v280 = vand.u32 %v77, 4294901760
    %281 = vmatpush.msra.mxu0 %v280
    %v282 = vand.u32 %v76, 4294901760
    %283 = vmatpush.msra.mxu0 %v282
    %v284 = vand.u32 %v75, 4294901760
    %285 = vmatpush.msra.mxu0 %v284
    %v286 = vand.u32 %v74, 4294901760
    %287 = vmatpush.msra.mxu0 %v286
    %v288 = vand.u32 %v73, 4294901760
    %289 = vmatpush.msra.mxu0 %v288
    %v290 = vand.u32 %v72, 4294901760
    %291 = vmatpush.msra.mxu0 %v290
    %v292 = vand.u32 %v71, 4294901760
    %293 = vmatpush.msra.mxu0 %v292
    %v294 = vand.u32 %v70, 4294901760
    %295 = vmatpush.msra.mxu0 %v294
    %v296 = vand.u32 %v69, 4294901760
    %297 = vmatpush.msra.mxu0 %v296
    %v298 = vand.u32 %v68, 4294901760
    %299 = vmatpush.msra.mxu0 %v298
    %v300 = vand.u32 %v67, 4294901760
    %301 = vmatpush.msra.mxu0 %v300
    %v302 = vand.u32 %v66, 4294901760
    %303 = vmatpush.msra.mxu0 %v302
    %v304 = vand.u32 %v65, 4294901760
    %305 = vmatpush.msra.mxu0 %v304
    %v306 = vand.u32 %v64, 4294901760
    %307 = vmatpush.msra.mxu0 %v306
    %v308 = vand.u32 %v63, 4294901760
    %v309 = vsub.f32 %v63, %v308
    %v310 = vand.u32 %v309, 4294901760
    %311 = vmatmul.f32.gmra.mxu0 %v310
    %v312 = vpop.f32.mrf.mxu0
    %v313 = vadd.f32 %v274, %v312
    %314 = vdwg.mxu0
    %v315 = vand.u32 %v79, 4294901760
    %v316 = vsub.f32 %v79, %v315
    %v317 = vand.u32 %v316, 4294901760
    %318 = vmatpush.msra.mxu0 %v317
    %v319 = vand.u32 %v78, 4294901760
    %v320 = vsub.f32 %v78, %v319
    %v321 = vand.u32 %v320, 4294901760
    %322 = vmatpush.msra.mxu0 %v321
    %v323 = vand.u32 %v77, 4294901760
    %v324 = vsub.f32 %v77, %v323
    %v325 = vand.u32 %v324, 4294901760
    %326 = vmatpush.msra.mxu0 %v325
    %v327 = vand.u32 %v76, 4294901760
    %v328 = vsub.f32 %v76, %v327
    %v329 = vand.u32 %v328, 4294901760
    %330 = vmatpush.msra.mxu0 %v329
    %v331 = vand.u32 %v75, 4294901760
    %v332 = vsub.f32 %v75, %v331
    %v333 = vand.u32 %v332, 4294901760
    %334 = vmatpush.msra.mxu0 %v333
    %v335 = vand.u32 %v74, 4294901760
    %v336 = vsub.f32 %v74, %v335
    %v337 = vand.u32 %v336, 4294901760
    %338 = vmatpush.msra.mxu0 %v337
    %v339 = vand.u32 %v73, 4294901760
    %v340 = vsub.f32 %v73, %v339
    %v341 = vand.u32 %v340, 4294901760
    %342 = vmatpush.msra.mxu0 %v341
    %v343 = vand.u32 %v72, 4294901760
    %v344 = vsub.f32 %v72, %v343
    %v345 = vand.u32 %v344, 4294901760
    %346 = vmatpush.msra.mxu0 %v345
    %v347 = vand.u32 %v71, 4294901760
    %v348 = vsub.f32 %v71, %v347
    %v349 = vand.u32 %v348, 4294901760
    %350 = vmatpush.msra.mxu0 %v349
    %v351 = vand.u32 %v70, 4294901760
    %v352 = vsub.f32 %v70, %v351
    %v353 = vand.u32 %v352, 4294901760
    %354 = vmatpush.msra.mxu0 %v353
    %v355 = vand.u32 %v69, 4294901760
    %v356 = vsub.f32 %v69, %v355
    %v357 = vand.u32 %v356, 4294901760
    %358 = vmatpush.msra.mxu0 %v357
    %v359 = vand.u32 %v68, 4294901760
    %v360 = vsub.f32 %v68, %v359
    %v361 = vand.u32 %v360, 4294901760
    %362 = vmatpush.msra.mxu0 %v361
    %v363 = vand.u32 %v67, 4294901760
    %v364 = vsub.f32 %v67, %v363
    %v365 = vand.u32 %v364, 4294901760
    %366 = vmatpush.msra.mxu0 %v365
    %v367 = vand.u32 %v66, 4294901760
    %v368 = vsub.f32 %v66, %v367
    %v369 = vand.u32 %v368, 4294901760
    %370 = vmatpush.msra.mxu0 %v369
    %v371 = vand.u32 %v65, 4294901760
    %v372 = vsub.f32 %v65, %v371
    %v373 = vand.u32 %v372, 4294901760
    %374 = vmatpush.msra.mxu0 %v373
    %v375 = vand.u32 %v64, 4294901760
    %v376 = vsub.f32 %v64, %v375
    %v377 = vand.u32 %v376, 4294901760
    %378 = vmatpush.msra.mxu0 %v377
    %v379 = vand.u32 %v63, 4294901760
    %380 = vmatmul.f32.gmra.mxu0 %v379
    %v381 = vpop.f32.mrf.mxu0
    %v382 = vadd.f32 %v313, %v381
    %383 = vdwg.mxu0
    %v384 = vand.u32 %v79, 4294901760
    %385 = vmatpush.msra.mxu0 %v384
    %v386 = vand.u32 %v78, 4294901760
    %387 = vmatpush.msra.mxu0 %v386
    %v388 = vand.u32 %v77, 4294901760
    %389 = vmatpush.msra.mxu0 %v388
    %v390 = vand.u32 %v76, 4294901760
    %391 = vmatpush.msra.mxu0 %v390
    %v392 = vand.u32 %v75, 4294901760
    %393 = vmatpush.msra.mxu0 %v392
    %v394 = vand.u32 %v74, 4294901760
    %395 = vmatpush.msra.mxu0 %v394
    %v396 = vand.u32 %v73, 4294901760
    %397 = vmatpush.msra.mxu0 %v396
    %v398 = vand.u32 %v72, 4294901760
    %399 = vmatpush.msra.mxu0 %v398
    %v400 = vand.u32 %v71, 4294901760
    %401 = vmatpush.msra.mxu0 %v400
    %v402 = vand.u32 %v70, 4294901760
    %403 = vmatpush.msra.mxu0 %v402
    %v404 = vand.u32 %v69, 4294901760
    %405 = vmatpush.msra.mxu0 %v404
    %v406 = vand.u32 %v68, 4294901760
    %407 = vmatpush.msra.mxu0 %v406
    %v408 = vand.u32 %v67, 4294901760
    %409 = vmatpush.msra.mxu0 %v408
    %v410 = vand.u32 %v66, 4294901760
    %411 = vmatpush.msra.mxu0 %v410
    %v412 = vand.u32 %v65, 4294901760
    %413 = vmatpush.msra.mxu0 %v412
    %v414 = vand.u32 %v64, 4294901760
    %415 = vmatpush.msra.mxu0 %v414
    %v416 = vand.u32 %v63, 4294901760
    %417 = vmatmul.f32.gmra.mxu0 %v416
    %v418 = vpop.f32.mrf.mxu0
    %v419 = vadd.f32 %v382, %v418
    %420 = vdwg.mxu0
    %421 = vst [vmem:[#allocation8] sm:$0xf] %v419
    // Predicated region
    $region26: #{tpu_custom_call.1} parent=1 // pred_check
      _
    $region27: #{tpu_custom_call.1} parent=1 // pred_check_branch
      %423 = sbr.rel (0) target = $region29
    $region28: #{tpu_custom_call.1} parent=1 // pred_region
      %425 = vsyncadd [#allocation4], 0
      %s427 = sshll.u32 [#allocation8], 4
      %s428 = int_to_ptr.vmem [resolvable:$true] %s427
      %s429 = sshll.u32 %s3, 4
      %s430 = int_to_ptr.hbm [resolvable:$true] %s429
      %432 = dma.vmem_to_hbm [thread:$0]  %s428, 64, %s430, [#allocation4]
    $region29: #{tpu_custom_call.1} parent=1 // pred_fallthru
      _
    // Predicated region
    $region30: #{tpu_custom_call.1} parent=1 // pred_check
      _
    $region31: #{tpu_custom_call.1} parent=1 // pred_check_branch
      %434 = sbr.rel (0) target = $region33
    $region32: #{tpu_custom_call.1} parent=1 // pred_region
      %436 = dma.done [#allocation4], 64
    $region33: #{tpu_custom_call.1} parent=1 // pred_fallthru
      _
    %437 = vsyncpa [#allocation3], 1
    %438 = vsyncpa [#allocation6], 1
    %439 = vsyncpa [#allocation4], 1

</llo_original>
